<compile_context>
chip_gen: v5e
topology: v5e:2x2
jax: 0.10.0
libtpu: 0.0.40
codegen_flags: <defaults>
</compile_context>

<pallas_src>
import math

import jax
import jax.numpy as jnp
import numpy as np
from jax.experimental import pallas as pl
from jax.experimental.pallas import tpu as pltpu


# --------------------------------------------------------------------------
# Parameter setup (mirrors FixedEmbedding.__init__, deterministic, no files)
# --------------------------------------------------------------------------
def fixed_embedding_table(c_in: int, d_model: int) -> jnp.ndarray:
    position = jnp.arange(c_in, dtype=jnp.float32)[:, None]
    div_term = jnp.exp(
        jnp.arange(0, d_model, 2, dtype=jnp.float32) * -(math.log(10000.0) / d_model)
    )
    w = jnp.zeros((c_in, d_model), dtype=jnp.float32)
    w = w.at[:, 0::2].set(jnp.sin(position * div_term))
    w = w.at[:, 1::2].set(jnp.cos(position * div_term))
    return w


# --------------------------------------------------------------------------
# Pallas kernel (factory closes over the static per-feature table offsets)
# --------------------------------------------------------------------------
def make_temporal_embedding_kernel(offsets):
    offsets = tuple(int(o) for o in offsets)  # Python ints, baked into the IR

    def kernel(ids_ref, w_ref, out_ref):
        # ids_ref: (TILE, F) int32 raw time-feature ids
        # w_ref:   (K_PAD, D) float32 concatenated + zero-padded tables
        # out_ref: (TILE, D) float32
        ids = ids_ref[...]
        tile = ids.shape[0]
        k_pad = w_ref.shape[0]

        col = jax.lax.broadcasted_iota(jnp.int32, (tile, k_pad), 1)
        # Offsets make the hit columns of different features disjoint, so a
        # boolean OR is exactly the multi-hot sum (one cast at the end).
        hit = col == (ids[:, 0:1] + offsets[0])
        for f in range(1, len(offsets)):
            hit = hit | (col == (ids[:, f : f + 1] + offsets[f]))

        multihot = hit.astype(jnp.float32)
        # One f32 MXU matmul == sum of the five embedding gathers (exact:
        # multi-hot entries are 0/1, padded W rows are zero).
        out_ref[...] = jnp.dot(
            multihot, w_ref[...], preferred_element_type=jnp.float32
        )

    return kernel


# --------------------------------------------------------------------------
# Wrapper
# --------------------------------------------------------------------------
class TemporalEmbeddingPallas:
    # feature order in x: [month, day, weekday, hour, minute]
    SIZES = (13, 32, 7, 24, 4)  # month, day, weekday, hour, minute
    K_PAD = 128                 # lane-aligned contraction dim (>= sum(SIZES)=80)
    VMEM_LIMIT = 32 * 1024 * 1024   # raise v5e's 16 MiB default; = v6e/v7x default
    VMEM_BUDGET = 24 * 1024 * 1024  # keep headroom below the scoped limit

    def __init__(self, d_model: int, embed_type: str = "fixed", freq: str = "h"):
        assert embed_type == "fixed", "only fixed (sinusoidal) tables built here"
        self.d_model = d_model
        self.freq = freq
        self.num_feats = 5 if freq == "t" else 4
        sizes = self.SIZES[: self.num_feats]
        self.tables = [fixed_embedding_table(s, d_model) for s in sizes]

        w = jnp.concatenate(self.tables, axis=0)            # (sum(sizes), d)
        total = int(sum(sizes))
        assert total <= self.K_PAD
        self.W = jnp.pad(w, ((0, self.K_PAD - total), (0, 0)))  # (128, d)

        offs = np.concatenate([[0], np.cumsum(sizes)[:-1]]).astype(np.int32)
        self._kernel = make_temporal_embedding_kernel(offs)

    # VMEM-aware tile choice (multiple of 8).
    def _choose_tile(self, n: int, requested: int) -> int:
        d = self.d_model
        tile = min(int(requested), max(8, ((n + 7) // 8) * 8))
        tile = max(8, (tile // 8) * 8)

        def vmem_bytes(t):
            return 4 * (
                2 * t * d                  # out block, double-buffered
                + 2 * t * self.K_PAD       # ids block (lane-padded to 128), x2
                + 2 * self.K_PAD * d       # W (resident, but budget x2)
                + 3 * t * self.K_PAD       # iota + mask + multihot temporaries
            )

        while tile > 8 and vmem_bytes(tile) > self.VMEM_BUDGET:
            tile = max(8, (tile // 2 // 8) * 8)
        return tile

    def __call__(self, x, tile: int = 2048):
        B, L, F = x.shape
        assert F >= self.num_feats
        ids = x[..., : self.num_feats].astype(jnp.int32).reshape(B * L, self.num_feats)

        n = B * L
        d = self.d_model
        tile = self._choose_tile(n, tile)
        grid = pl.cdiv(n, tile)  # last block may be partial: OOB ids reads are
        #                          harmless (only used in compares) and OOB
        #                          output writes are discarded by Pallas.

        out = pl.pallas_call(
            self._kernel,
            out_shape=jax.ShapeDtypeStruct((n, d), jnp.float32),
            grid_spec=pltpu.PrefetchScalarGridSpec(
                num_scalar_prefetch=0,
                grid=(grid,),
                in_specs=[
                    pl.BlockSpec((tile, self.num_feats), lambda i: (i, 0)),
                    pl.BlockSpec((self.K_PAD, d), lambda i: (0, 0)),  # W resident
                ],
                out_specs=pl.BlockSpec((tile, d), lambda i: (i, 0)),
            ),
            compiler_params=pltpu.CompilerParams(
                dimension_semantics=("parallel",),
                vmem_limit_bytes=self.VMEM_LIMIT,
            ),
        )(ids, self.W)

        return out.reshape(B, L, d)  # row-major compatible -> no copy pass

    def reference(self, x):
        # Pure-JAX reference matching the PyTorch forward.
        x = x[..., : self.num_feats].astype(jnp.int32)
        out = jnp.zeros(x.shape[:2] + (self.d_model,), jnp.float32)
        for f, tbl in enumerate(self.tables):
            out = out + jnp.take(tbl, x[..., f], axis=0)
        return out


# --------------------------------------------------------------------------
if __name__ == "__main__":
    B, L, d_model = 2, 24, 128
    key = jax.random.PRNGKey(0)
    k_mo, k_dy, k_wd, k_hr, k_mi = jax.random.split(key, 5)

    month = jax.random.randint(k_mo, (B, L), 0, 13)
    day = jax.random.randint(k_dy, (B, L), 0, 32)
    weekday = jax.random.randint(k_wd, (B, L), 0, 7)
    hour = jax.random.randint(k_hr, (B, L), 0, 24)
    minute = jax.random.randint(k_mi, (B, L), 0, 4)
    # layout: x is (B, L, 5) = [month, day, weekday, hour, minute]
    x = jnp.stack([month, day, weekday, hour, minute], axis=-1)

    model = TemporalEmbeddingPallas(d_model, embed_type="fixed", freq="t")

    out = model(x)
    out = jax.block_until_ready(out)

    ref = model.reference(x)
    assert out.shape == (B, L, d_model)
    assert jnp.allclose(out, ref, atol=1e-5, rtol=1e-5), "mismatch vs reference"

    print("KERNEL_OK")
</pallas_src>

<mosaic_0001>
module attributes {stable_mosaic.version = 11 : i64} {
  func.func @kernel(%arg0: i32, %arg1: memref<48x5xi32, #tpu.memory_space<vmem>>, %arg2: memref<128x128xf32, #tpu.memory_space<vmem>>, %arg3: memref<48x128xf32, #tpu.memory_space<vmem>>) attributes {dimension_semantics = [#tpu.dimension_semantics<parallel>], iteration_bounds = array<i64: 1>, scalar_prefetch = 0 : i64, scratch_operands = 0 : i64, tpu.core_type = #tpu.core_type<tc>, window_params = [{transform_indices = @transform_0, window_bounds = array<i64: 48, 5>}, {pipeline_mode = #tpu.pipeline_mode<synchronous>, transform_indices = @transform_1, window_bounds = array<i64: 128, 128>}, {transform_indices = @transform_2, window_bounds = array<i64: 48, 128>}]} {
    %c0 = arith.constant 0 : index
    %c0_0 = arith.constant 0 : index
    %0 = vector.load %arg1[%c0, %c0_0] : memref<48x5xi32, #tpu.memory_space<vmem>>, vector<48x5xi32>
    %1 = tpu.iota {dimensions = array<i32: 1>} : vector<48x128xi32>
    %2 = vector.extract_strided_slice %0 {offsets = [0, 0], sizes = [48, 1], strides = [1, 1]} : vector<48x5xi32> to vector<48x1xi32>
    %c0_i32 = arith.constant 0 : i32
    %3 = vector.broadcast %c0_i32 : i32 to vector<48x1xi32>
    %4 = arith.addi %2, %3 : vector<48x1xi32>
    %5 = vector.broadcast %4 : vector<48x1xi32> to vector<48x128xi32>
    %6 = arith.cmpi eq, %1, %5 : vector<48x128xi32>
    %7 = vector.extract_strided_slice %0 {offsets = [0, 1], sizes = [48, 1], strides = [1, 1]} : vector<48x5xi32> to vector<48x1xi32>
    %c13_i32 = arith.constant 13 : i32
    %8 = vector.broadcast %c13_i32 : i32 to vector<48x1xi32>
    %9 = arith.addi %7, %8 : vector<48x1xi32>
    %10 = vector.broadcast %9 : vector<48x1xi32> to vector<48x128xi32>
    %11 = arith.cmpi eq, %1, %10 : vector<48x128xi32>
    %12 = arith.ori %6, %11 : vector<48x128xi1>
    %13 = vector.extract_strided_slice %0 {offsets = [0, 2], sizes = [48, 1], strides = [1, 1]} : vector<48x5xi32> to vector<48x1xi32>
    %c45_i32 = arith.constant 45 : i32
    %14 = vector.broadcast %c45_i32 : i32 to vector<48x1xi32>
    %15 = arith.addi %13, %14 : vector<48x1xi32>
    %16 = vector.broadcast %15 : vector<48x1xi32> to vector<48x128xi32>
    %17 = arith.cmpi eq, %1, %16 : vector<48x128xi32>
    %18 = arith.ori %12, %17 : vector<48x128xi1>
    %19 = vector.extract_strided_slice %0 {offsets = [0, 3], sizes = [48, 1], strides = [1, 1]} : vector<48x5xi32> to vector<48x1xi32>
    %c52_i32 = arith.constant 52 : i32
    %20 = vector.broadcast %c52_i32 : i32 to vector<48x1xi32>
    %21 = arith.addi %19, %20 : vector<48x1xi32>
    %22 = vector.broadcast %21 : vector<48x1xi32> to vector<48x128xi32>
    %23 = arith.cmpi eq, %1, %22 : vector<48x128xi32>
    %24 = arith.ori %18, %23 : vector<48x128xi1>
    %25 = vector.extract_strided_slice %0 {offsets = [0, 4], sizes = [48, 1], strides = [1, 1]} : vector<48x5xi32> to vector<48x1xi32>
    %c76_i32 = arith.constant 76 : i32
    %26 = vector.broadcast %c76_i32 : i32 to vector<48x1xi32>
    %27 = arith.addi %25, %26 : vector<48x1xi32>
    %28 = vector.broadcast %27 : vector<48x1xi32> to vector<48x128xi32>
    %29 = arith.cmpi eq, %1, %28 : vector<48x128xi32>
    %30 = arith.ori %24, %29 : vector<48x128xi1>
    %31 = arith.extui %30 : vector<48x128xi1> to vector<48x128xi32>
    %32 = arith.sitofp %31 : vector<48x128xi32> to vector<48x128xf32>
    %c0_1 = arith.constant 0 : index
    %c0_2 = arith.constant 0 : index
    %33 = vector.load %arg2[%c0_1, %c0_2] : memref<128x128xf32, #tpu.memory_space<vmem>>, vector<128x128xf32>
    %cst = arith.constant dense<0.000000e+00> : vector<48x128xf32>
    %34 = tpu.matmul %32, %33, %cst {dimension_numbers = #tpu.dot_dimension_numbers<[1], [0], [0], [1], [0, 0, 1, 1], [], []>} : vector<48x128xf32>, vector<128x128xf32>, vector<48x128xf32> -> vector<48x128xf32>
    %c0_3 = arith.constant 0 : index
    %c0_4 = arith.constant 0 : index
    %35 = vector.load %arg3[%c0_3, %c0_4] : memref<48x128xf32, #tpu.memory_space<vmem>>, vector<48x128xf32>
    tpu.vector_store %arg3[%c0_3, %c0_4], %34 {strides = array<i32>} : memref<48x128xf32, #tpu.memory_space<vmem>>, vector<48x128xf32>,
    return
  }
  func.func @transform_0(%arg0: i32) -> (i32, i32) {
    %c0_i32 = arith.constant 0 : i32
    %c0_i32_0 = arith.constant 0 : i32
    return %arg0, %c0_i32 : i32, i32
  }
  func.func @transform_1(%arg0: i32) -> (i32, i32) {
    %c0_i32 = arith.constant 0 : i32
    %c0_i32_0 = arith.constant 0 : i32
    %c0_i32_1 = arith.constant 0 : i32
    return %c0_i32, %c0_i32_0 : i32, i32
  }
  func.func @transform_2(%arg0: i32) -> (i32, i32) {
    %c0_i32 = arith.constant 0 : i32
    %c0_i32_0 = arith.constant 0 : i32
    return %arg0, %c0_i32 : i32, i32
  }
}

</mosaic_0001>

<llo_original>
// kernel: tpu_custom_call.1
$region0: #{tpu_custom_call.1}
  #allocation0 [shape = 'u32[]', space=smem, size = 0x4, offset = 0x4, fixed_abs, tag = 'smem constant byte address 0x4 - core index']
  #allocation1 [shape = 'u32[72,128]{1,0:T(1,128)}', space=vmem, size = 0x9000, scoped, tag = 'internal scratch']
  %s0 = inlined_call_operand.vmem [shape: s32[48,5], index: 0, kind: input, shape index: {}]
  %s1 = inlined_call_operand.hbm [shape: f32[128,128], index: 1, kind: input, shape index: {}]
  %s2 = inlined_call_operand.hbm [shape: f32[48,128], index: 2, kind: output, shape index: {}]
  %s3 = sld [smem:[#allocation0]]
  $region22: #{tpu_custom_call.1} parent=0
    _
  %s5 = ssub.s32 1, %s3
  %s6 = scalar_select 0, %s5, %s3
  $region1: #{tpu_custom_call.1} parent=0
    #allocation2 [shape = 'u8[65536]{0}', space=vmem, size = 0x10000, scoped, tag = 'input window, operand 1, single buffered']
    #allocation3 [shape = 's32[1]{0}', space=sflag, size = 0x4, scoped, tag = 'scoped memory for tpu_custom_call.1']
    #allocation4 [shape = 's32[1]{0}', space=sflag, size = 0x4, scoped, tag = 'scoped memory for tpu_custom_call.1']
    #allocation5 [shape = 'u8[24576]{0}', space=vmem, size = 0x6000, scoped, tag = 'output window, operand 0, single buffered']
    %7 = vsyncpa [#allocation3], 0
    %8 = vsyncpa [#allocation4], 0
    // Predicated region
    $region2: #{tpu_custom_call.1} parent=1 // pred_check
      _
    $region3: #{tpu_custom_call.1} parent=1 // pred_check_branch
      %10 = sbr.rel (0) target = $region5
    $region4: #{tpu_custom_call.1} parent=1 // pred_region
      _
    $region5: #{tpu_custom_call.1} parent=1 // pred_fallthru
      _
    // Predicated region
    $region6: #{tpu_custom_call.1} parent=1 // pred_check
      _
    $region7: #{tpu_custom_call.1} parent=1 // pred_check_branch
      %12 = sbr.rel (0) target = $region9
    $region8: #{tpu_custom_call.1} parent=1 // pred_region
      %14 = vsyncadd [#allocation3], 0
      %s15 = sshll.u32 %s1, 4
      %s16 = int_to_ptr.hbm [resolvable:$true] %s15
      %s17 = sshll.u32 [#allocation2], 4
      %s18 = int_to_ptr.vmem [resolvable:$true] %s17
      %23 = dma.hbm_to_vmem [thread:$0]  %s16, 2048, %s18, [#allocation3], 128, 128, 8
    $region9: #{tpu_custom_call.1} parent=1 // pred_fallthru
      _
    // Predicated region
    $region10: #{tpu_custom_call.1} parent=1 // pred_check
      _
    $region11: #{tpu_custom_call.1} parent=1 // pred_check_branch
      %25 = sbr.rel (0) target = $region13
    $region12: #{tpu_custom_call.1} parent=1 // pred_region
      %27 = dma.done [#allocation3], 2048
    $region13: #{tpu_custom_call.1} parent=1 // pred_fallthru
      _
    %v28 = vld [vmem:[%s0] sm:$0xff]
    %v29 = vld [vmem:[%s0 + $0x8] sm:$0xff]
    %v30 = vld [vmem:[%s0 + $0x10] sm:$0xff]
    %v31 = vld [vmem:[%s0 + $0x18] sm:$0xff]
    %v32 = vld [vmem:[%s0 + $0x20] sm:$0xff]
    %v33 = vld [vmem:[%s0 + $0x28] sm:$0xff]
    %v34 = vlaneseq
    %v35 = vand.u32 %v34, 127
    %36 = vset.pattern.permute.xlu0 0
    %37 = vperm.xlu0 %36, %v28
    %v38 = vpop.permute.xlu0 %37
    %39 = vset.pattern.permute.xlu0 0
    %40 = vperm.xlu0 %39, %v29
    %v41 = vpop.permute.xlu0 %40
    %42 = vset.pattern.permute.xlu0 0
    %43 = vperm.xlu0 %42, %v30
    %v44 = vpop.permute.xlu0 %43
    %45 = vset.pattern.permute.xlu0 0
    %46 = vperm.xlu0 %45, %v31
    %v47 = vpop.permute.xlu0 %46
    %48 = vset.pattern.permute.xlu0 0
    %49 = vperm.xlu0 %48, %v32
    %v50 = vpop.permute.xlu0 %49
    %51 = vset.pattern.permute.xlu0 0
    %52 = vperm.xlu0 %51, %v33
    %v53 = vpop.permute.xlu0 %52
    %vm54 = vcmp.eq.s32.totalorder %v35, %v38
    %vm55 = vcmp.eq.s32.totalorder %v35, %v41
    %vm56 = vcmp.eq.s32.totalorder %v35, %v44
    %vm57 = vcmp.eq.s32.totalorder %v35, %v47
    %vm58 = vcmp.eq.s32.totalorder %v35, %v50
    %vm59 = vcmp.eq.s32.totalorder %v35, %v53
    %v60 = vadd.s32 %v28, 13
    %v61 = vadd.s32 %v29, 13
    %v62 = vadd.s32 %v30, 13
    %v63 = vadd.s32 %v31, 13
    %v64 = vadd.s32 %v32, 13
    %v65 = vadd.s32 %v33, 13
    %66 = vset.pattern.permute.xlu0 1
    %67 = vperm.xlu0 %66, %v60
    %v68 = vpop.permute.xlu0 %67
    %69 = vset.pattern.permute.xlu0 1
    %70 = vperm.xlu0 %69, %v61
    %v71 = vpop.permute.xlu0 %70
    %72 = vset.pattern.permute.xlu0 1
    %73 = vperm.xlu0 %72, %v62
    %v74 = vpop.permute.xlu0 %73
    %75 = vset.pattern.permute.xlu0 1
    %76 = vperm.xlu0 %75, %v63
    %v77 = vpop.permute.xlu0 %76
    %78 = vset.pattern.permute.xlu0 1
    %79 = vperm.xlu0 %78, %v64
    %v80 = vpop.permute.xlu0 %79
    %81 = vset.pattern.permute.xlu0 1
    %82 = vperm.xlu0 %81, %v65
    %v83 = vpop.permute.xlu0 %82
    %vm84 = vcmp.eq.s32.totalorder %v35, %v68
    %vm85 = vcmp.eq.s32.totalorder %v35, %v71
    %vm86 = vcmp.eq.s32.totalorder %v35, %v74
    %vm87 = vcmp.eq.s32.totalorder %v35, %v77
    %vm88 = vcmp.eq.s32.totalorder %v35, %v80
    %vm89 = vcmp.eq.s32.totalorder %v35, %v83
    %vm90 = vmor %vm54, %vm84
    %vm91 = vmor %vm55, %vm85
    %vm92 = vmor %vm56, %vm86
    %vm93 = vmor %vm57, %vm87
    %vm94 = vmor %vm58, %vm88
    %vm95 = vmor %vm59, %vm89
    %v96 = vadd.s32 %v28, 45
    %v97 = vadd.s32 %v29, 45
    %v98 = vadd.s32 %v30, 45
    %v99 = vadd.s32 %v31, 45
    %v100 = vadd.s32 %v32, 45
    %v101 = vadd.s32 %v33, 45
    %102 = vset.pattern.permute.xlu0 2
    %103 = vperm.xlu0 %102, %v96
    %v104 = vpop.permute.xlu0 %103
    %105 = vset.pattern.permute.xlu0 2
    %106 = vperm.xlu0 %105, %v97
    %v107 = vpop.permute.xlu0 %106
    %108 = vset.pattern.permute.xlu0 2
    %109 = vperm.xlu0 %108, %v98
    %v110 = vpop.permute.xlu0 %109
    %111 = vset.pattern.permute.xlu0 2
    %112 = vperm.xlu0 %111, %v99
    %v113 = vpop.permute.xlu0 %112
    %114 = vset.pattern.permute.xlu0 2
    %115 = vperm.xlu0 %114, %v100
    %v116 = vpop.permute.xlu0 %115
    %117 = vset.pattern.permute.xlu0 2
    %118 = vperm.xlu0 %117, %v101
    %v119 = vpop.permute.xlu0 %118
    %vm120 = vcmp.eq.s32.totalorder %v35, %v104
    %vm121 = vcmp.eq.s32.totalorder %v35, %v107
    %vm122 = vcmp.eq.s32.totalorder %v35, %v110
    %vm123 = vcmp.eq.s32.totalorder %v35, %v113
    %vm124 = vcmp.eq.s32.totalorder %v35, %v116
    %vm125 = vcmp.eq.s32.totalorder %v35, %v119
    %vm126 = vmor %vm90, %vm120
    %vm127 = vmor %vm91, %vm121
    %vm128 = vmor %vm92, %vm122
    %vm129 = vmor %vm93, %vm123
    %vm130 = vmor %vm94, %vm124
    %vm131 = vmor %vm95, %vm125
    %v132 = vadd.s32 %v28, 52
    %v133 = vadd.s32 %v29, 52
    %v134 = vadd.s32 %v30, 52
    %v135 = vadd.s32 %v31, 52
    %v136 = vadd.s32 %v32, 52
    %v137 = vadd.s32 %v33, 52
    %138 = vset.pattern.permute.xlu0 3
    %139 = vperm.xlu0 %138, %v132
    %v140 = vpop.permute.xlu0 %139
    %141 = vset.pattern.permute.xlu0 3
    %142 = vperm.xlu0 %141, %v133
    %v143 = vpop.permute.xlu0 %142
    %144 = vset.pattern.permute.xlu0 3
    %145 = vperm.xlu0 %144, %v134
    %v146 = vpop.permute.xlu0 %145
    %147 = vset.pattern.permute.xlu0 3
    %148 = vperm.xlu0 %147, %v135
    %v149 = vpop.permute.xlu0 %148
    %150 = vset.pattern.permute.xlu0 3
    %151 = vperm.xlu0 %150, %v136
    %v152 = vpop.permute.xlu0 %151
    %153 = vset.pattern.permute.xlu0 3
    %154 = vperm.xlu0 %153, %v137
    %v155 = vpop.permute.xlu0 %154
    %vm156 = vcmp.eq.s32.totalorder %v35, %v140
    %vm157 = vcmp.eq.s32.totalorder %v35, %v143
    %vm158 = vcmp.eq.s32.totalorder %v35, %v146
    %vm159 = vcmp.eq.s32.totalorder %v35, %v149
    %vm160 = vcmp.eq.s32.totalorder %v35, %v152
    %vm161 = vcmp.eq.s32.totalorder %v35, %v155
    %vm162 = vmor %vm126, %vm156
    %vm163 = vmor %vm127, %vm157
    %vm164 = vmor %vm128, %vm158
    %vm165 = vmor %vm129, %vm159
    %vm166 = vmor %vm130, %vm160
    %vm167 = vmor %vm131, %vm161
    %v168 = vadd.s32 %v28, 76
    %v169 = vadd.s32 %v29, 76
    %v170 = vadd.s32 %v30, 76
    %v171 = vadd.s32 %v31, 76
    %v172 = vadd.s32 %v32, 76
    %v173 = vadd.s32 %v33, 76
    %174 = vset.pattern.permute.xlu0 4
    %175 = vperm.xlu0 %174, %v168
    %v176 = vpop.permute.xlu0 %175
    %177 = vset.pattern.permute.xlu0 4
    %178 = vperm.xlu0 %177, %v169
    %v179 = vpop.permute.xlu0 %178
    %180 = vset.pattern.permute.xlu0 4
    %181 = vperm.xlu0 %180, %v170
    %v182 = vpop.permute.xlu0 %181
    %183 = vset.pattern.permute.xlu0 4
    %184 = vperm.xlu0 %183, %v171
    %v185 = vpop.permute.xlu0 %184
    %186 = vset.pattern.permute.xlu0 4
    %187 = vperm.xlu0 %186, %v172
    %v188 = vpop.permute.xlu0 %187
    %189 = vset.pattern.permute.xlu0 4
    %190 = vperm.xlu0 %189, %v173
    %v191 = vpop.permute.xlu0 %190
    %vm192 = vcmp.eq.s32.totalorder %v35, %v176
    %vm193 = vcmp.eq.s32.totalorder %v35, %v179
    %vm194 = vcmp.eq.s32.totalorder %v35, %v182
    %vm195 = vcmp.eq.s32.totalorder %v35, %v185
    %vm196 = vcmp.eq.s32.totalorder %v35, %v188
    %vm197 = vcmp.eq.s32.totalorder %v35, %v191
    %vm198 = vmor %vm162, %vm192
    %vm199 = vmor %vm163, %vm193
    %vm200 = vmor %vm164, %vm194
    %vm201 = vmor %vm165, %vm195
    %vm202 = vmor %vm166, %vm196
    %vm203 = vmor %vm167, %vm197
    %v204 = vsel %vm198, 1, 0
    %v205 = vsel %vm199, 1, 0
    %v206 = vsel %vm200, 1, 0
    %v207 = vsel %vm201, 1, 0
    %v208 = vsel %vm202, 1, 0
    %v209 = vsel %vm203, 1, 0
    %v210 = vcvt.s32.f32 %v204
    %v211 = vcvt.s32.f32 %v205
    %v212 = vcvt.s32.f32 %v206
    %v213 = vcvt.s32.f32 %v207
    %v214 = vcvt.s32.f32 %v208
    %v215 = vcvt.s32.f32 %v209
    %v216 = vld [vmem:[#allocation2] sm:$0xff]
    %v217 = vld [vmem:[#allocation2 + $0x8] sm:$0xff]
    %v218 = vld [vmem:[#allocation2 + $0x10] sm:$0xff]
    %v219 = vld [vmem:[#allocation2 + $0x18] sm:$0xff]
    %v220 = vld [vmem:[#allocation2 + $0x20] sm:$0xff]
    %v221 = vld [vmem:[#allocation2 + $0x28] sm:$0xff]
    %v222 = vld [vmem:[#allocation2 + $0x30] sm:$0xff]
    %v223 = vld [vmem:[#allocation2 + $0x38] sm:$0xff]
    %v224 = vld [vmem:[#allocation2 + $0x40] sm:$0xff]
    %v225 = vld [vmem:[#allocation2 + $0x48] sm:$0xff]
    %v226 = vld [vmem:[#allocation2 + $0x50] sm:$0xff]
    %v227 = vld [vmem:[#allocation2 + $0x58] sm:$0xff]
    %v228 = vld [vmem:[#allocation2 + $0x60] sm:$0xff]
    %v229 = vld [vmem:[#allocation2 + $0x68] sm:$0xff]
    %v230 = vld [vmem:[#allocation2 + $0x70] sm:$0xff]
    %v231 = vld [vmem:[#allocation2 + $0x78] sm:$0xff]
    %232 = vmatpush.msra.mxu0 %v231
    %233 = vmatpush.msra.mxu0 %v230
    %234 = vmatpush.msra.mxu0 %v229
    %235 = vmatpush.msra.mxu0 %v228
    %236 = vmatpush.msra.mxu0 %v227
    %237 = vmatpush.msra.mxu0 %v226
    %238 = vmatpush.msra.mxu0 %v225
    %239 = vmatpush.msra.mxu0 %v224
    %240 = vmatpush.msra.mxu0 %v223
    %241 = vmatpush.msra.mxu0 %v222
    %242 = vmatpush.msra.mxu0 %v221
    %243 = vmatpush.msra.mxu0 %v220
    %244 = vmatpush.msra.mxu0 %v219
    %245 = vmatpush.msra.mxu0 %v218
    %246 = vmatpush.msra.mxu0 %v217
    %247 = vmatpush.msra.mxu0 %v216
    %248 = vmatmul.f32.gmra.mxu0 %v210
    %v249 = vpop.f32.mrf.mxu0
    %v250 = vadd.f32 0.0, %v249
    %251 = vmatmul.f32.gmra.mxu0 %v211
    %v252 = vpop.f32.mrf.mxu0
    %v253 = vadd.f32 0.0, %v252
    %254 = vmatmul.f32.gmra.mxu0 %v212
    %v255 = vpop.f32.mrf.mxu0
    %v256 = vadd.f32 0.0, %v255
    %257 = vmatmul.f32.gmra.mxu0 %v213
    %v258 = vpop.f32.mrf.mxu0
    %v259 = vadd.f32 0.0, %v258
    %260 = vmatmul.f32.gmra.mxu0 %v214
    %v261 = vpop.f32.mrf.mxu0
    %v262 = vadd.f32 0.0, %v261
    %263 = vmatmul.f32.gmra.mxu0 %v215
    %v264 = vpop.f32.mrf.mxu0
    %v265 = vadd.f32 0.0, %v264
    %266 = vdwg.mxu0
    %267 = vst [vmem:[#allocation5] sm:$0xff] %v250
    %268 = vst [vmem:[#allocation5 + $0x8] sm:$0xff] %v253
    %269 = vst [vmem:[#allocation5 + $0x10] sm:$0xff] %v256
    %270 = vst [vmem:[#allocation5 + $0x18] sm:$0xff] %v259
    %271 = vst [vmem:[#allocation5 + $0x20] sm:$0xff] %v262
    %272 = vst [vmem:[#allocation5 + $0x28] sm:$0xff] %v265
    // Predicated region
    $region14: #{tpu_custom_call.1} parent=1 // pred_check
      _
    $region15: #{tpu_custom_call.1} parent=1 // pred_check_branch
      %274 = sbr.rel (0) target = $region17
    $region16: #{tpu_custom_call.1} parent=1 // pred_region
      %276 = vsyncadd [#allocation4], 0
      %s277 = sshll.u32 [#allocation5], 4
      %s278 = int_to_ptr.vmem [resolvable:$true] %s277
      %s279 = sshll.u32 %s2, 4
      %s280 = int_to_ptr.hbm [resolvable:$true] %s279
      %285 = dma.vmem_to_hbm [thread:$0]  %s278, 768, %s280, [#allocation4], 128, 128, 8
    $region17: #{tpu_custom_call.1} parent=1 // pred_fallthru
      _
    // Predicated region
    $region18: #{tpu_custom_call.1} parent=1 // pred_check
      _
    $region19: #{tpu_custom_call.1} parent=1 // pred_check_branch
      %287 = sbr.rel (0) target = $region21
    $region20: #{tpu_custom_call.1} parent=1 // pred_region
      %289 = dma.done [#allocation4], 768
    $region21: #{tpu_custom_call.1} parent=1 // pred_fallthru
      _
    %290 = vsyncpa [#allocation3], 1
    %291 = vsyncpa [#allocation4], 1

</llo_original>
